<compile_context>
chip_gen: v7x
topology: tpu7x:2x2x1
jax: 0.10.0
libtpu: 0.0.40
codegen_flags: <defaults>
</compile_context>

<pallas_src>
import functools
import math

import jax
import jax.numpy as jnp
from jax.experimental import pallas as pl
from jax.experimental.pallas import tpu as pltpu

LANE = 128       # TPU lane width: pad all feature/hidden/class dims to this
SUBLANE = 8      # f32 sublane height: pad node count N to a multiple of this


def _round_up(x, m):
    return (x + m - 1) // m * m


def _pad2(a, rows, cols, dtype=jnp.float32):
    a = jnp.asarray(a, jnp.float32)
    r, c = a.shape
    return jnp.pad(a, ((0, rows - r), (0, cols - c))).astype(dtype)


def _vmem_tile_bytes(shape, dtype):
    """Layout-aware VMEM bytes of a 2-D array (sublane/lane padding included)."""
    r, c = shape
    itemsize = jnp.dtype(dtype).itemsize
    sublane = SUBLANE * (4 // itemsize)          # 8 for f32, 16 for bf16
    return _round_up(max(r, 1), sublane) * _round_up(max(c, 1), LANE) * itemsize


@functools.lru_cache(maxsize=1)
def _vmem_budget_bytes():
    """Per-generation VMEM budget for the fused single-block path (capacity - headroom)."""
    try:
        capacity = int(pltpu.get_tpu_info().vmem_capacity_bytes)
    except Exception:
        capacity = 64 * 1024 * 1024              # conservative fallback (v7x-sized)
    return max(capacity - (8 << 20), 16 << 20)


# ----------------------------------------------------------------------------
# Fused kernel: 4x (adj @ (h @ W) + b, ReLU)  ->  Linear  ->  log_softmax
# ----------------------------------------------------------------------------
def _fused_gcn_kernel(nclass, compute_dtype,
                      x_ref, adj_ref,
                      w1_ref, b1_ref, w2_ref, b2_ref,
                      w3_ref, b3_ref, w4_ref, b4_ref,
                      wfc_ref, bfc_ref,
                      o_ref):
    adj = adj_ref[...]                               # already in compute_dtype (host cast)
    h = x_ref[...]                                   # f32 activations

    for w_ref, b_ref in ((w1_ref, b1_ref), (w2_ref, b2_ref),
                         (w3_ref, b3_ref), (w4_ref, b4_ref)):
        support = jnp.dot(h.astype(compute_dtype), w_ref[...],
                          preferred_element_type=jnp.float32)
        out = jnp.dot(adj, support.astype(compute_dtype),
                      preferred_element_type=jnp.float32)
        h = jnp.maximum(out + b_ref[...], 0.0)       # bias + ReLU in f32 (VPU)
        # F.dropout(..., training=False) == identity

    logits = jnp.dot(h.astype(compute_dtype), wfc_ref[...],
                     preferred_element_type=jnp.float32) + bfc_ref[...]

    # Mask the zero-padded class lanes so they do not enter the softmax denominator.
    lane_idx = jax.lax.broadcasted_iota(jnp.int32, logits.shape, dimension=1)
    logits = jnp.where(lane_idx < nclass, logits, -1e30)

    m = jnp.max(logits, axis=-1, keepdims=True)
    z = logits - m
    lse = jnp.log(jnp.sum(jnp.exp(z), axis=-1, keepdims=True))
    o_ref[...] = z - lse


_VMEM_SPEC = pl.BlockSpec(memory_space=pltpu.MemorySpace.VMEM)


# ----------------------------------------------------------------------------
# One-time parameter preparation (pad / transpose / cast) -- hoisted off the
# per-call path.  Biases stay f32 (VPU elementwise); weights go to compute_dtype.
# ----------------------------------------------------------------------------
def prepare_params(params, compute_dtype=jnp.bfloat16):
    nfeat, nhid = params["gc1_w"].shape
    nclass = params["fc_w"].shape[0]

    f_p = _round_up(max(nfeat, 1), LANE)
    h_p = _round_up(max(nhid, 1), LANE)
    c_p = _round_up(max(nclass, 1), LANE)

    padded = {
        "w1": _pad2(params["gc1_w"], f_p, h_p, compute_dtype),
        "w2": _pad2(params["gc2_w"], h_p, h_p, compute_dtype),
        "w3": _pad2(params["gc3_w"], h_p, h_p, compute_dtype),
        "w4": _pad2(params["gc4_w"], h_p, h_p, compute_dtype),
        "b1": _pad2(params["gc1_b"].reshape(1, -1), 1, h_p),
        "b2": _pad2(params["gc2_b"].reshape(1, -1), 1, h_p),
        "b3": _pad2(params["gc3_b"].reshape(1, -1), 1, h_p),
        "b4": _pad2(params["gc4_b"].reshape(1, -1), 1, h_p),
        "wfc": _pad2(params["fc_w"].T, h_p, c_p, compute_dtype),   # nn.Linear is (nclass, nhid)
        "bfc": _pad2(params["fc_b"].reshape(1, -1), 1, c_p),
    }
    padded = jax.tree_util.tree_map(jax.device_put, padded)
    meta = {"nfeat": nfeat, "nhid": nhid, "nclass": nclass}
    return padded, meta


# ----------------------------------------------------------------------------
# Forward: per call, only x and adj are padded (and adj cast to compute_dtype).
# ----------------------------------------------------------------------------
@functools.partial(jax.jit, static_argnames=("nclass",))
def _forward_impl(padded, x, adj, *, nclass):
    n, nfeat = x.shape
    compute_dtype = padded["w1"].dtype
    f_p, h_p = padded["w1"].shape
    c_p = padded["wfc"].shape[1]
    nhid = padded["w2"].shape[0]  # padded; real nhid only affects the cost estimate below
    n_p = max(_round_up(n, SUBLANE), SUBLANE)

    x_p = _pad2(x, n_p, f_p)                              # f32 activations
    adj_p = _pad2(adj, n_p, n_p, compute_dtype)           # bf16 halves adj DMA/VMEM bytes

    operands = (x_p, adj_p,
                padded["w1"], padded["b1"], padded["w2"], padded["b2"],
                padded["w3"], padded["b3"], padded["w4"], padded["b4"],
                padded["wfc"], padded["bfc"])

    # Layout-aware VMEM footprint (operands + output + a few f32 intermediates).
    vmem_bytes = sum(_vmem_tile_bytes(op.shape, op.dtype) for op in operands)
    vmem_bytes += _vmem_tile_bytes((n_p, c_p), jnp.float32)           # output
    vmem_bytes += 3 * _vmem_tile_bytes((n_p, h_p), jnp.float32)       # live intermediates
    budget = _vmem_budget_bytes()
    assert vmem_bytes < budget, (
        "graph too large for the fused single-block kernel; see TODO(synk) at top of file")

    # Cost estimate from REAL (unpadded) dims; bytes = actual HBM traffic of this call.
    nhid_real = min(nhid, padded["b1"].shape[1])  # padded; use meta via nclass path below
    # (flops use the true problem sizes: nfeat from x, nclass passed in, nhid from b1 pre-pad
    #  is unavailable here, so approximate with the original hidden width stored in meta by
    #  the caller via closure-free arithmetic: the padded b1 width equals h_p; the real nhid
    #  is <= h_p, and for scheduling purposes the dominant terms are the N^2 ones.)
    nhid_est = nhid_real
    flops = (2 * n * nfeat * nhid_est + 2 * n * n * nhid_est
             + 3 * (2 * n * nhid_est * nhid_est + 2 * n * n * nhid_est)
             + 2 * n * nhid_est * nclass)
    hbm_bytes = (sum(op.size * op.dtype.itemsize for op in operands)
                 + n_p * c_p * 4)
    cost = pl.CostEstimate(flops=flops,
                           transcendentals=n * nclass + n,
                           bytes_accessed=hbm_bytes)

    out_padded = pl.pallas_call(
        functools.partial(_fused_gcn_kernel, nclass, compute_dtype),
        out_shape=jax.ShapeDtypeStruct((n_p, c_p), jnp.float32),
        in_specs=[_VMEM_SPEC] * len(operands),
        out_specs=_VMEM_SPEC,
        cost_estimate=cost,
        compiler_params=pltpu.CompilerParams(
            vmem_limit_bytes=int(min(budget, vmem_bytes + (8 << 20)))),
    )(*operands)

    return out_padded[:n, :nclass]


def nn_forward(prepared, x, adj):
    padded, meta = prepared
    return _forward_impl(padded, x, adj, nclass=meta["nclass"])


# ----------------------------------------------------------------------------
# Parameter init mirroring the PyTorch module's reset_parameters()
# ----------------------------------------------------------------------------
def init_params(key, nfeat, nhid, nclass):
    params = {}
    dims = [(nfeat, nhid), (nhid, nhid), (nhid, nhid), (nhid, nhid)]
    keys = jax.random.split(key, 2 * len(dims) + 2)
    for i, (fi, fo) in enumerate(dims):
        stdv = 1.0 / math.sqrt(fo)
        params[f"gc{i + 1}_w"] = jax.random.uniform(
            keys[2 * i], (fi, fo), jnp.float32, -stdv, stdv)
        params[f"gc{i + 1}_b"] = jax.random.uniform(
            keys[2 * i + 1], (fo,), jnp.float32, -stdv, stdv)
    stdv = 1.0 / math.sqrt(nhid)
    params["fc_w"] = jax.random.uniform(keys[-2], (nclass, nhid), jnp.float32, -stdv, stdv)
    params["fc_b"] = jax.random.uniform(keys[-1], (nclass,), jnp.float32, -stdv, stdv)
    return params


# ----------------------------------------------------------------------------
# Plain-JAX reference for sanity check
# ----------------------------------------------------------------------------
def nn_forward_ref(params, x, adj):
    h = x
    for i in range(1, 5):
        h = jnp.maximum(adj @ (h @ params[f"gc{i}_w"]) + params[f"gc{i}_b"], 0.0)
    logits = h @ params["fc_w"].T + params["fc_b"]
    return jax.nn.log_softmax(logits, axis=1)


if __name__ == "__main__":
    key = jax.random.PRNGKey(0)
    k_param, k_x, k_adj = jax.random.split(key, 3)

    N, nfeat, nhid, nclass = 16, 32, 32, 8
    params = init_params(k_param, nfeat, nhid, nclass)

    x = jax.random.normal(k_x, (N, nfeat), jnp.float32)
    # dense "sparse" adjacency: random nonnegative, row-normalized
    a = jax.random.uniform(k_adj, (N, N), jnp.float32)
    adj = a / jnp.sum(a, axis=1, keepdims=True)

    ref = nn_forward_ref(params, x, adj)

    # f32 MXU path (bit-faithful to the PyTorch module)
    prepared_f32 = prepare_params(params, compute_dtype=jnp.float32)
    out = jax.block_until_ready(nn_forward(prepared_f32, x, adj))
    assert out.shape == (N, nclass)
    assert jnp.allclose(out, ref, atol=1e-4, rtol=1e-4), "f32 kernel mismatch vs reference"

    # bf16 MXU-input path (default: f32 accumulation / f32 elementwise) — loose tolerance
    prepared_bf16 = prepare_params(params)            # compute_dtype defaults to bfloat16
    out_bf16 = jax.block_until_ready(nn_forward(prepared_bf16, x, adj))
    assert out_bf16.shape == (N, nclass)
    assert jnp.allclose(out_bf16, ref, atol=3e-1), "bf16 kernel diverged from reference"

    print("KERNEL_OK")
</pallas_src>

<mosaic_0001>
module attributes {stable_mosaic.version = 11 : i64} {
  func.func @_fused_gcn_kernel(%arg0: memref<16x128xf32, #tpu.memory_space<vmem>>, %arg1: memref<16x16xf32, #tpu.memory_space<vmem>>, %arg2: memref<128x128xf32, #tpu.memory_space<vmem>>, %arg3: memref<1x128xf32, #tpu.memory_space<vmem>>, %arg4: memref<128x128xf32, #tpu.memory_space<vmem>>, %arg5: memref<1x128xf32, #tpu.memory_space<vmem>>, %arg6: memref<128x128xf32, #tpu.memory_space<vmem>>, %arg7: memref<1x128xf32, #tpu.memory_space<vmem>>, %arg8: memref<128x128xf32, #tpu.memory_space<vmem>>, %arg9: memref<1x128xf32, #tpu.memory_space<vmem>>, %arg10: memref<128x128xf32, #tpu.memory_space<vmem>>, %arg11: memref<1x128xf32, #tpu.memory_space<vmem>>, %arg12: memref<16x128xf32, #tpu.memory_space<vmem>>) attributes {dimension_semantics = [], scalar_prefetch = 0 : i64, scratch_operands = 0 : i64, tpu.core_type = #tpu.core_type<tc>} {
    %c0 = arith.constant 0 : index
    %c0_0 = arith.constant 0 : index
    %0 = vector.load %arg1[%c0, %c0_0] : memref<16x16xf32, #tpu.memory_space<vmem>>, vector<16x16xf32>
    %c0_1 = arith.constant 0 : index
    %c0_2 = arith.constant 0 : index
    %1 = vector.load %arg0[%c0_1, %c0_2] : memref<16x128xf32, #tpu.memory_space<vmem>>, vector<16x128xf32>
    %c0_3 = arith.constant 0 : index
    %c0_4 = arith.constant 0 : index
    %2 = vector.load %arg2[%c0_3, %c0_4] : memref<128x128xf32, #tpu.memory_space<vmem>>, vector<128x128xf32>
    %cst = arith.constant dense<0.000000e+00> : vector<16x128xf32>
    %3 = tpu.matmul %1, %2, %cst {dimension_numbers = #tpu.dot_dimension_numbers<[1], [0], [0], [1], [0, 0, 1, 1], [], []>} : vector<16x128xf32>, vector<128x128xf32>, vector<16x128xf32> -> vector<16x128xf32>
    %cst_5 = arith.constant dense<0.000000e+00> : vector<16x128xf32>
    %4 = tpu.matmul %0, %3, %cst_5 {dimension_numbers = #tpu.dot_dimension_numbers<[1], [0], [0], [1], [0, 0, 1, 1], [], []>} : vector<16x16xf32>, vector<16x128xf32>, vector<16x128xf32> -> vector<16x128xf32>
    %c0_6 = arith.constant 0 : index
    %c0_7 = arith.constant 0 : index
    %5 = vector.load %arg3[%c0_6, %c0_7] : memref<1x128xf32, #tpu.memory_space<vmem>>, vector<1x128xf32>
    %6 = vector.broadcast %5 : vector<1x128xf32> to vector<16x128xf32>
    %7 = arith.addf %4, %6 : vector<16x128xf32>
    %cst_8 = arith.constant 0.000000e+00 : f32
    %8 = vector.broadcast %cst_8 : f32 to vector<16x128xf32>
    %9 = arith.maximumf %7, %8 : vector<16x128xf32>
    %c0_9 = arith.constant 0 : index
    %c0_10 = arith.constant 0 : index
    %10 = vector.load %arg4[%c0_9, %c0_10] : memref<128x128xf32, #tpu.memory_space<vmem>>, vector<128x128xf32>
    %cst_11 = arith.constant dense<0.000000e+00> : vector<16x128xf32>
    %11 = tpu.matmul %9, %10, %cst_11 {dimension_numbers = #tpu.dot_dimension_numbers<[1], [0], [0], [1], [0, 0, 1, 1], [], []>} : vector<16x128xf32>, vector<128x128xf32>, vector<16x128xf32> -> vector<16x128xf32>
    %cst_12 = arith.constant dense<0.000000e+00> : vector<16x128xf32>
    %12 = tpu.matmul %0, %11, %cst_12 {dimension_numbers = #tpu.dot_dimension_numbers<[1], [0], [0], [1], [0, 0, 1, 1], [], []>} : vector<16x16xf32>, vector<16x128xf32>, vector<16x128xf32> -> vector<16x128xf32>
    %c0_13 = arith.constant 0 : index
    %c0_14 = arith.constant 0 : index
    %13 = vector.load %arg5[%c0_13, %c0_14] : memref<1x128xf32, #tpu.memory_space<vmem>>, vector<1x128xf32>
    %14 = vector.broadcast %13 : vector<1x128xf32> to vector<16x128xf32>
    %15 = arith.addf %12, %14 : vector<16x128xf32>
    %cst_15 = arith.constant 0.000000e+00 : f32
    %16 = vector.broadcast %cst_15 : f32 to vector<16x128xf32>
    %17 = arith.maximumf %15, %16 : vector<16x128xf32>
    %c0_16 = arith.constant 0 : index
    %c0_17 = arith.constant 0 : index
    %18 = vector.load %arg6[%c0_16, %c0_17] : memref<128x128xf32, #tpu.memory_space<vmem>>, vector<128x128xf32>
    %cst_18 = arith.constant dense<0.000000e+00> : vector<16x128xf32>
    %19 = tpu.matmul %17, %18, %cst_18 {dimension_numbers = #tpu.dot_dimension_numbers<[1], [0], [0], [1], [0, 0, 1, 1], [], []>} : vector<16x128xf32>, vector<128x128xf32>, vector<16x128xf32> -> vector<16x128xf32>
    %cst_19 = arith.constant dense<0.000000e+00> : vector<16x128xf32>
    %20 = tpu.matmul %0, %19, %cst_19 {dimension_numbers = #tpu.dot_dimension_numbers<[1], [0], [0], [1], [0, 0, 1, 1], [], []>} : vector<16x16xf32>, vector<16x128xf32>, vector<16x128xf32> -> vector<16x128xf32>
    %c0_20 = arith.constant 0 : index
    %c0_21 = arith.constant 0 : index
    %21 = vector.load %arg7[%c0_20, %c0_21] : memref<1x128xf32, #tpu.memory_space<vmem>>, vector<1x128xf32>
    %22 = vector.broadcast %21 : vector<1x128xf32> to vector<16x128xf32>
    %23 = arith.addf %20, %22 : vector<16x128xf32>
    %cst_22 = arith.constant 0.000000e+00 : f32
    %24 = vector.broadcast %cst_22 : f32 to vector<16x128xf32>
    %25 = arith.maximumf %23, %24 : vector<16x128xf32>
    %c0_23 = arith.constant 0 : index
    %c0_24 = arith.constant 0 : index
    %26 = vector.load %arg8[%c0_23, %c0_24] : memref<128x128xf32, #tpu.memory_space<vmem>>, vector<128x128xf32>
    %cst_25 = arith.constant dense<0.000000e+00> : vector<16x128xf32>
    %27 = tpu.matmul %25, %26, %cst_25 {dimension_numbers = #tpu.dot_dimension_numbers<[1], [0], [0], [1], [0, 0, 1, 1], [], []>} : vector<16x128xf32>, vector<128x128xf32>, vector<16x128xf32> -> vector<16x128xf32>
    %cst_26 = arith.constant dense<0.000000e+00> : vector<16x128xf32>
    %28 = tpu.matmul %0, %27, %cst_26 {dimension_numbers = #tpu.dot_dimension_numbers<[1], [0], [0], [1], [0, 0, 1, 1], [], []>} : vector<16x16xf32>, vector<16x128xf32>, vector<16x128xf32> -> vector<16x128xf32>
    %c0_27 = arith.constant 0 : index
    %c0_28 = arith.constant 0 : index
    %29 = vector.load %arg9[%c0_27, %c0_28] : memref<1x128xf32, #tpu.memory_space<vmem>>, vector<1x128xf32>
    %30 = vector.broadcast %29 : vector<1x128xf32> to vector<16x128xf32>
    %31 = arith.addf %28, %30 : vector<16x128xf32>
    %cst_29 = arith.constant 0.000000e+00 : f32
    %32 = vector.broadcast %cst_29 : f32 to vector<16x128xf32>
    %33 = arith.maximumf %31, %32 : vector<16x128xf32>
    %c0_30 = arith.constant 0 : index
    %c0_31 = arith.constant 0 : index
    %34 = vector.load %arg10[%c0_30, %c0_31] : memref<128x128xf32, #tpu.memory_space<vmem>>, vector<128x128xf32>
    %cst_32 = arith.constant dense<0.000000e+00> : vector<16x128xf32>
    %35 = tpu.matmul %33, %34, %cst_32 {dimension_numbers = #tpu.dot_dimension_numbers<[1], [0], [0], [1], [0, 0, 1, 1], [], []>} : vector<16x128xf32>, vector<128x128xf32>, vector<16x128xf32> -> vector<16x128xf32>
    %c0_33 = arith.constant 0 : index
    %c0_34 = arith.constant 0 : index
    %36 = vector.load %arg11[%c0_33, %c0_34] : memref<1x128xf32, #tpu.memory_space<vmem>>, vector<1x128xf32>
    %37 = vector.broadcast %36 : vector<1x128xf32> to vector<16x128xf32>
    %38 = arith.addf %35, %37 : vector<16x128xf32>
    %39 = tpu.iota {dimensions = array<i32: 1>} : vector<16x128xi32>
    %c8_i32 = arith.constant 8 : i32
    %40 = vector.broadcast %c8_i32 : i32 to vector<16x128xi32>
    %41 = arith.cmpi slt, %39, %40 : vector<16x128xi32>
    %cst_35 = arith.constant -1.000000e+30 : f32
    %42 = vector.broadcast %cst_35 : f32 to vector<16x128xf32>
    %43 = arith.select %41, %38, %42 : vector<16x128xi1>, vector<16x128xf32>
    %cst_36 = arith.constant dense<0xFF800000> : vector<16xf32>
    %44 = vector.multi_reduction <maximumf>, %43, %cst_36 [1] : vector<16x128xf32> to vector<16xf32>
    %45 = vector.shape_cast %44 : vector<16xf32> to vector<16x1xf32>
    %46 = vector.broadcast %45 : vector<16x1xf32> to vector<16x128xf32>
    %47 = arith.subf %43, %46 : vector<16x128xf32>
    %48 = math.exp %47 : vector<16x128xf32>
    %cst_37 = arith.constant dense<0.000000e+00> : vector<16xf32>
    %49 = vector.multi_reduction <add>, %48, %cst_37 [1] : vector<16x128xf32> to vector<16xf32>
    %50 = vector.shape_cast %49 : vector<16xf32> to vector<16x1xf32>
    %51 = math.log %50 : vector<16x1xf32>
    %52 = vector.broadcast %51 : vector<16x1xf32> to vector<16x128xf32>
    %53 = arith.subf %47, %52 : vector<16x128xf32>
    %c0_38 = arith.constant 0 : index
    %c0_39 = arith.constant 0 : index
    %54 = vector.load %arg12[%c0_38, %c0_39] : memref<16x128xf32, #tpu.memory_space<vmem>>, vector<16x128xf32>
    tpu.vector_store %arg12[%c0_38, %c0_39], %53 {strides = array<i32>} : memref<16x128xf32, #tpu.memory_space<vmem>>, vector<16x128xf32>,
    return
  }
}

</mosaic_0001>

<llo_original>
// kernel: _forward_impl.1
$region0: #{_forward_impl.1}
  #allocation0 [shape = 'u32[]', space=smem, size = 0x4, offset = 0x4, fixed_abs, tag = 'smem constant byte address 0x4 - core index']
  #allocation1 [shape = 'u32[144,128]{1,0:T(1,128)}', space=vmem, size = 0x12000, scoped, tag = 'internal scratch']
  %s0 = inlined_call_operand.vmem [shape: f32[16,128], index: 0, kind: input, shape index: {}]
  %s1 = inlined_call_operand.vmem [shape: f32[16,16], index: 1, kind: input, shape index: {}]
  %s2 = inlined_call_operand.hbm [shape: f32[128,128], index: 2, kind: input, shape index: {}]
  %s3 = inlined_call_operand.vmem [shape: f32[1,128], index: 3, kind: input, shape index: {}]
  %s4 = inlined_call_operand.hbm [shape: f32[128,128], index: 4, kind: input, shape index: {}]
  %s5 = inlined_call_operand.vmem [shape: f32[1,128], index: 5, kind: input, shape index: {}]
  %s6 = inlined_call_operand.hbm [shape: f32[128,128], index: 6, kind: input, shape index: {}]
  %s7 = inlined_call_operand.vmem [shape: f32[1,128], index: 7, kind: input, shape index: {}]
  %s8 = inlined_call_operand.hbm [shape: f32[128,128], index: 8, kind: input, shape index: {}]
  %s9 = inlined_call_operand.vmem [shape: f32[1,128], index: 9, kind: input, shape index: {}]
  %s10 = inlined_call_operand.hbm [shape: f32[128,128], index: 10, kind: input, shape index: {}]
  %s11 = inlined_call_operand.vmem [shape: f32[1,128], index: 11, kind: input, shape index: {}]
  %s12 = inlined_call_operand.vmem [shape: f32[16,128], index: 12, kind: output, shape index: {}]
  %s13 = sld [smem:[#allocation0]]
  $region78: #{_forward_impl.1} parent=0
    _
  %s15 = ssub.s32 1, %s13
  %s16 = scalar_select 0, %s15, %s13
  $region1: #{_forward_impl.1} parent=0
    #allocation2 [shape = 'u8[65536]{0}', space=vmem, size = 0x10000, scoped, tag = 'input window, operand 2, single buffered']
    #allocation3 [shape = 's32[1]{0}', space=sflag, size = 0x4, scoped, tag = 'scoped memory for _forward_impl.1']
    #allocation4 [shape = 'u8[65536]{0}', space=vmem, size = 0x10000, scoped, tag = 'input window, operand 4, single buffered']
    #allocation5 [shape = 's32[1]{0}', space=sflag, size = 0x4, scoped, tag = 'scoped memory for _forward_impl.1']
    #allocation6 [shape = 'u8[65536]{0}', space=vmem, size = 0x10000, scoped, tag = 'input window, operand 6, single buffered']
    #allocation7 [shape = 'u8[65536]{0}', space=vmem, size = 0x10000, scoped, tag = 'input window, operand 8, single buffered']
    #allocation8 [shape = 's32[1]{0}', space=sflag, size = 0x4, scoped, tag = 'scoped memory for _forward_impl.1']
    #allocation9 [shape = 'u8[65536]{0}', space=vmem, size = 0x10000, scoped, tag = 'input window, operand 10, single buffered']
    %17 = vsyncpa [#allocation3], 0
    %18 = vsyncpa [#allocation5], 0
    %19 = vsyncpa [#allocation8], 0
    // Predicated region
    $region2: #{_forward_impl.1} parent=1 // pred_check
      _
    $region3: #{_forward_impl.1} parent=1 // pred_check_branch
      %21 = sbr.rel (0) target = $region5
    $region4: #{_forward_impl.1} parent=1 // pred_region
      _
    $region5: #{_forward_impl.1} parent=1 // pred_fallthru
      _
    // Predicated region
    $region6: #{_forward_impl.1} parent=1 // pred_check
      _
    $region7: #{_forward_impl.1} parent=1 // pred_check_branch
      %23 = sbr.rel (0) target = $region9
    $region8: #{_forward_impl.1} parent=1 // pred_region
      _
    $region9: #{_forward_impl.1} parent=1 // pred_fallthru
      _
    // Predicated region
    $region10: #{_forward_impl.1} parent=1 // pred_check
      _
    $region11: #{_forward_impl.1} parent=1 // pred_check_branch
      %25 = sbr.rel (0) target = $region13
    $region12: #{_forward_impl.1} parent=1 // pred_region
      %s27 = ssub.s32 2048, 2048
      %28 = vsyncadd [#allocation3], %s27
      %s29 = sshll.u32 [#allocation2], 4
      %s30 = int_to_ptr.vmem [resolvable:$true] %s29
      %35 = dma.hbm_to_vmem [thread:$0]  %s2, 2048, %s30, [#allocation3], 128, 128, 8
    $region13: #{_forward_impl.1} parent=1 // pred_fallthru
      _
    // Predicated region
    $region14: #{_forward_impl.1} parent=1 // pred_check
      _
    $region15: #{_forward_impl.1} parent=1 // pred_check_branch
      %37 = sbr.rel (0) target = $region17
    $region16: #{_forward_impl.1} parent=1 // pred_region
      _
    $region17: #{_forward_impl.1} parent=1 // pred_fallthru
      _
    // Predicated region
    $region18: #{_forward_impl.1} parent=1 // pred_check
      _
    $region19: #{_forward_impl.1} parent=1 // pred_check_branch
      %39 = sbr.rel (0) target = $region21
    $region20: #{_forward_impl.1} parent=1 // pred_region
      %s41 = ssub.s32 2048, 2048
      %42 = vsyncadd [#allocation5], %s41
      %s43 = sshll.u32 [#allocation4], 4
      %s44 = int_to_ptr.vmem [resolvable:$true] %s43
      %49 = dma.hbm_to_vmem [thread:$0]  %s4, 2048, %s44, [#allocation5], 128, 128, 8
    $region21: #{_forward_impl.1} parent=1 // pred_fallthru
      _
    // Predicated region
    $region22: #{_forward_impl.1} parent=1 // pred_check
      _
    $region23: #{_forward_impl.1} parent=1 // pred_check_branch
      %51 = sbr.rel (0) target = $region25
    $region24: #{_forward_impl.1} parent=1 // pred_region
      _
    $region25: #{_forward_impl.1} parent=1 // pred_fallthru
      _
    // Predicated region
    $region26: #{_forward_impl.1} parent=1 // pred_check
      _
    $region27: #{_forward_impl.1} parent=1 // pred_check_branch
      %53 = sbr.rel (0) target = $region29
    $region28: #{_forward_impl.1} parent=1 // pred_region
      %s55 = ssub.s32 2048, 2048
      %56 = vsyncadd [#allocation5], %s55
      %s57 = sshll.u32 [#allocation6], 4
      %s58 = int_to_ptr.vmem [resolvable:$true] %s57
      %63 = dma.hbm_to_vmem [thread:$0]  %s6, 2048, %s58, [#allocation5], 128, 128, 8
    $region29: #{_forward_impl.1} parent=1 // pred_fallthru
      _
    // Predicated region
    $region30: #{_forward_impl.1} parent=1 // pred_check
      _
    $region31: #{_forward_impl.1} parent=1 // pred_check_branch
      %65 = sbr.rel (0) target = $region33
    $region32: #{_forward_impl.1} parent=1 // pred_region
      _
    $region33: #{_forward_impl.1} parent=1 // pred_fallthru
      _
    // Predicated region
    $region34: #{_forward_impl.1} parent=1 // pred_check
      _
    $region35: #{_forward_impl.1} parent=1 // pred_check_branch
      %67 = sbr.rel (0) target = $region37
    $region36: #{_forward_impl.1} parent=1 // pred_region
      %s69 = ssub.s32 2048, 2048
      %70 = vsyncadd [#allocation8], %s69
      %s71 = sshll.u32 [#allocation7], 4
      %s72 = int_to_ptr.vmem [resolvable:$true] %s71
      %77 = dma.hbm_to_vmem [thread:$0]  %s8, 2048, %s72, [#allocation8], 128, 128, 8
    $region37: #{_forward_impl.1} parent=1 // pred_fallthru
      _
    // Predicated region
    $region38: #{_forward_impl.1} parent=1 // pred_check
      _
    $region39: #{_forward_impl.1} parent=1 // pred_check_branch
      %79 = sbr.rel (0) target = $region41
    $region40: #{_forward_impl.1} parent=1 // pred_region
      _
    $region41: #{_forward_impl.1} parent=1 // pred_fallthru
      _
    // Predicated region
    $region42: #{_forward_impl.1} parent=1 // pred_check
      _
    $region43: #{_forward_impl.1} parent=1 // pred_check_branch
      %81 = sbr.rel (0) target = $region45
    $region44: #{_forward_impl.1} parent=1 // pred_region
      %s83 = ssub.s32 2048, 2048
      %84 = vsyncadd [#allocation8], %s83
      %s85 = sshll.u32 [#allocation9], 4
      %s86 = int_to_ptr.vmem [resolvable:$true] %s85
      %91 = dma.hbm_to_vmem [thread:$0]  %s10, 2048, %s86, [#allocation8], 128, 128, 8
    $region45: #{_forward_impl.1} parent=1 // pred_fallthru
      _
    // Predicated region
    $region46: #{_forward_impl.1} parent=1 // pred_check
      _
    $region47: #{_forward_impl.1} parent=1 // pred_check_branch
      %93 = sbr.rel (0) target = $region49
    $region48: #{_forward_impl.1} parent=1 // pred_region
      _
    $region49: #{_forward_impl.1} parent=1 // pred_fallthru
      _
    // Predicated region
    $region50: #{_forward_impl.1} parent=1 // pred_check
      _
    $region51: #{_forward_impl.1} parent=1 // pred_check_branch
      %95 = sbr.rel (0) target = $region53
    $region52: #{_forward_impl.1} parent=1 // pred_region
      %96 = dma.done [#allocation3], 2048
    $region53: #{_forward_impl.1} parent=1 // pred_fallthru
      _
    // Predicated region
    $region54: #{_forward_impl.1} parent=1 // pred_check
      _
    $region55: #{_forward_impl.1} parent=1 // pred_check_branch
      %98 = sbr.rel (0) target = $region57
    $region56: #{_forward_impl.1} parent=1 // pred_region
      %99 = dma.done [#allocation5], 2048
    $region57: #{_forward_impl.1} parent=1 // pred_fallthru
      _
    // Predicated region
    $region58: #{_forward_impl.1} parent=1 // pred_check
      _
    $region59: #{_forward_impl.1} parent=1 // pred_check_branch
      %101 = sbr.rel (0) target = $region61
    $region60: #{_forward_impl.1} parent=1 // pred_region
      %102 = dma.done [#allocation5], 2048
    $region61: #{_forward_impl.1} parent=1 // pred_fallthru
      _
    // Predicated region
    $region62: #{_forward_impl.1} parent=1 // pred_check
      _
    $region63: #{_forward_impl.1} parent=1 // pred_check_branch
      %104 = sbr.rel (0) target = $region65
    $region64: #{_forward_impl.1} parent=1 // pred_region
      %105 = dma.done [#allocation8], 2048
    $region65: #{_forward_impl.1} parent=1 // pred_fallthru
      _
    // Predicated region
    $region66: #{_forward_impl.1} parent=1 // pred_check
      _
    $region67: #{_forward_impl.1} parent=1 // pred_check_branch
      %107 = sbr.rel (0) target = $region69
    $region68: #{_forward_impl.1} parent=1 // pred_region
      %108 = dma.done [#allocation8], 2048
    $region69: #{_forward_impl.1} parent=1 // pred_fallthru
      _
    %v109 = vld [vmem:[%s1] sm:$0xff]
    %v110 = vld [vmem:[%s1 + $0x8] sm:$0xff]
    %v111 = vld [vmem:[%s0] sm:$0xff]
    %v112 = vld [vmem:[%s0 + $0x8] sm:$0xff]
    %v113 = vld [vmem:[#allocation2] sm:$0xff]
    %v114 = vld [vmem:[#allocation2 + $0x8] sm:$0xff]
    %v115 = vld [vmem:[#allocation2 + $0x10] sm:$0xff]
    %v116 = vld [vmem:[#allocation2 + $0x18] sm:$0xff]
    %v117 = vld [vmem:[#allocation2 + $0x20] sm:$0xff]
    %v118 = vld [vmem:[#allocation2 + $0x28] sm:$0xff]
    %v119 = vld [vmem:[#allocation2 + $0x30] sm:$0xff]
    %v120 = vld [vmem:[#allocation2 + $0x38] sm:$0xff]
    %v121 = vld [vmem:[#allocation2 + $0x40] sm:$0xff]
    %v122 = vld [vmem:[#allocation2 + $0x48] sm:$0xff]
    %v123 = vld [vmem:[#allocation2 + $0x50] sm:$0xff]
    %v124 = vld [vmem:[#allocation2 + $0x58] sm:$0xff]
    %v125 = vld [vmem:[#allocation2 + $0x60] sm:$0xff]
    %v126 = vld [vmem:[#allocation2 + $0x68] sm:$0xff]
    %v127 = vld [vmem:[#allocation2 + $0x70] sm:$0xff]
    %v128 = vld [vmem:[#allocation2 + $0x78] sm:$0xff]
    %129 = vmatprep.subr.mxu0 0.0
    %130 = vmatpush1.msra.mxu0 %v113
    %131 = vmatprep.subr.mxu0 0.0
    %132 = vmatpush1.msra.mxu0 %v114
    %133 = vmatprep.subr.mxu0 0.0
    %134 = vmatpush1.msra.mxu0 %v115
    %135 = vmatprep.subr.mxu0 0.0
    %136 = vmatpush1.msra.mxu0 %v116
    %137 = vmatprep.subr.mxu0 0.0
    %138 = vmatpush1.msra.mxu0 %v117
    %139 = vmatprep.subr.mxu0 0.0
    %140 = vmatpush1.msra.mxu0 %v118
    %141 = vmatprep.subr.mxu0 0.0
    %142 = vmatpush1.msra.mxu0 %v119
    %143 = vmatprep.subr.mxu0 0.0
    %144 = vmatpush1.msra.mxu0 %v120
    %145 = vmatprep.subr.mxu0 0.0
    %146 = vmatpush1.msra.mxu0 %v121
    %147 = vmatprep.subr.mxu0 0.0
    %148 = vmatpush1.msra.mxu0 %v122
    %149 = vmatprep.subr.mxu0 0.0
    %150 = vmatpush1.msra.mxu0 %v123
    %151 = vmatprep.subr.mxu0 0.0
    %152 = vmatpush1.msra.mxu0 %v124
    %153 = vmatprep.subr.mxu0 0.0
    %154 = vmatpush1.msra.mxu0 %v125
    %155 = vmatprep.subr.mxu0 0.0
    %156 = vmatpush1.msra.mxu0 %v126
    %157 = vmatprep.subr.mxu0 0.0
    %158 = vmatpush1.msra.mxu0 %v127
    %159 = vmatprep.subr.mxu0 0.0
    %160 = vmatpush1.msra.mxu0 %v128
    %161 = vmatprep.subr.mxu0 0.0
    %162 = vmatpush1.msra.mxu0 0.0
    %163 = vmatprep.subr.mxu0 0.0
    %164 = vmatpush1.msra.mxu0 0.0
    %165 = vmatprep.subr.mxu0 0.0
    %166 = vmatpush1.msra.mxu0 0.0
    %167 = vmatprep.subr.mxu0 0.0
    %168 = vmatpush1.msra.mxu0 0.0
    %169 = vmatprep.subr.mxu0 0.0
    %170 = vmatpush1.msra.mxu0 0.0
    %171 = vmatprep.subr.mxu0 0.0
    %172 = vmatpush1.msra.mxu0 0.0
    %173 = vmatprep.subr.mxu0 0.0
    %174 = vmatpush1.msra.mxu0 0.0
    %175 = vmatprep.subr.mxu0 0.0
    %176 = vmatpush1.msra.mxu0 0.0
    %177 = vmatprep.subr.mxu0 0.0
    %178 = vmatpush1.msra.mxu0 0.0
    %179 = vmatprep.subr.mxu0 0.0
    %180 = vmatpush1.msra.mxu0 0.0
    %181 = vmatprep.subr.mxu0 0.0
    %182 = vmatpush1.msra.mxu0 0.0
    %183 = vmatprep.subr.mxu0 0.0
    %184 = vmatpush1.msra.mxu0 0.0
    %185 = vmatprep.subr.mxu0 0.0
    %186 = vmatpush1.msra.mxu0 0.0
    %187 = vmatprep.subr.mxu0 0.0
    %188 = vmatpush1.msra.mxu0 0.0
    %189 = vmatprep.subr.mxu0 0.0
    %190 = vmatpush1.msra.mxu0 0.0
    %191 = vmatprep.subr.mxu0 0.0
    %192 = vmatpush1.msra.mxu0 0.0
    %193 = vmatprep.mubr.f32.mxu0 0.0
    %194 = vmatmul.mubr.f32.gmra.mrb[0].mxu0 %v111
    %v195 = vpop.f32.mrb[0].mxu0
    %v196 = vadd.f32 0.0, %v195
    %v197 = vpop.f32.mrb[0].mxu0
    %198 = vmatprep.mubr.f32.mxu0 0.0
    %199 = vmatmul.mubr.f32.gmra.mrb[0].mxu0 %v112
    %v200 = vpop.f32.mrb[0].mxu0
    %v201 = vadd.f32 0.0, %v200
    %v202 = vpop.f32.mrb[0].mxu0
    %203 = vdwg.mxu0
    %v204 = vld [vmem:[%s3] sm:$0x1]
    %v206 = vlaneseq
    %v207 = vshrl.u32 %v206, 7
    %v208 = vsub.s32 0, %v207
    %v209 = vrot.slane %v204, %v208
    %vm211 = vcmask 130048
    %v213 = vsel %vm211, %v109, 0
    %v216 = vsel %vm211, %v110, 0
    %218 = vmatprep.subr.mxu0 0.0
    %219 = vmatpush1.msra.mxu0 %v196
    %220 = vmatprep.subr.mxu0 0.0
    %221 = vmatpush1.msra.mxu0 %v201
    %222 = vmatprep.subr.mxu0 0.0
    %223 = vmatpush1.msra.mxu0 0.0
    %224 = vmatprep.subr.mxu0 0.0
    %225 = vmatpush1.msra.mxu0 0.0
    %226 = vmatprep.subr.mxu0 0.0
    %227 = vmatpush1.msra.mxu0 0.0
    %228 = vmatprep.subr.mxu0 0.0
    %229 = vmatpush1.msra.mxu0 0.0
    %230 = vmatprep.subr.mxu0 0.0
    %231 = vmatpush1.msra.mxu0 0.0
    %232 = vmatprep.subr.mxu0 0.0
    %233 = vmatpush1.msra.mxu0 0.0
    %234 = vmatprep.subr.mxu0 0.0
    %235 = vmatpush1.msra.mxu0 0.0
    %236 = vmatprep.subr.mxu0 0.0
    %237 = vmatpush1.msra.mxu0 0.0
    %238 = vmatprep.subr.mxu0 0.0
    %239 = vmatpush1.msra.mxu0 0.0
    %240 = vmatprep.subr.mxu0 0.0
    %241 = vmatpush1.msra.mxu0 0.0
    %242 = vmatprep.subr.mxu0 0.0
    %243 = vmatpush1.msra.mxu0 0.0
    %244 = vmatprep.subr.mxu0 0.0
    %245 = vmatpush1.msra.mxu0 0.0
    %246 = vmatprep.subr.mxu0 0.0
    %247 = vmatpush1.msra.mxu0 0.0
    %248 = vmatprep.subr.mxu0 0.0
    %249 = vmatpush1.msra.mxu0 0.0
    %250 = vmatprep.subr.mxu0 0.0
    %251 = vmatpush1.msra.mxu0 0.0
    %252 = vmatprep.subr.mxu0 0.0
    %253 = vmatpush1.msra.mxu0 0.0
    %254 = vmatprep.subr.mxu0 0.0
    %255 = vmatpush1.msra.mxu0 0.0
    %256 = vmatprep.subr.mxu0 0.0
    %257 = vmatpush1.msra.mxu0 0.0
    %258 = vmatprep.subr.mxu0 0.0
    %259 = vmatpush1.msra.mxu0 0.0
    %260 = vmatprep.subr.mxu0 0.0
    %261 = vmatpush1.msra.mxu0 0.0
    %262 = vmatprep.subr.mxu0 0.0
    %263 = vmatpush1.msra.mxu0 0.0
    %264 = vmatprep.subr.mxu0 0.0
    %265 = vmatpush1.msra.mxu0 0.0
    %266 = vmatprep.subr.mxu0 0.0
    %267 = vmatpush1.msra.mxu0 0.0
    %268 = vmatprep.subr.mxu0 0.0
    %269 = vmatpush1.msra.mxu0 0.0
    %270 = vmatprep.subr.mxu0 0.0
    %271 = vmatpush1.msra.mxu0 0.0
    %272 = vmatprep.subr.mxu0 0.0
    %273 = vmatpush1.msra.mxu0 0.0
    %274 = vmatprep.subr.mxu0 0.0
    %275 = vmatpush1.msra.mxu0 0.0
    %276 = vmatprep.subr.mxu0 0.0
    %277 = vmatpush1.msra.mxu0 0.0
    %278 = vmatprep.subr.mxu0 0.0
    %279 = vmatpush1.msra.mxu0 0.0
    %280 = vmatprep.subr.mxu0 0.0
    %281 = vmatpush1.msra.mxu0 0.0
    %282 = vmatprep.mubr.f32.mxu0 0.0
    %283 = vmatmul.mubr.f32.gmra.mrb[0].mxu0 %v213
    %v284 = vpop.f32.mrb[0].mxu0
    %v285 = vadd.f32 %v209, %v284
    %v286 = vpop.f32.mrb[0].mxu0
    %287 = vmatprep.mubr.f32.mxu0 0.0
    %288 = vmatmul.mubr.f32.gmra.mrb[0].mxu0 %v216
    %v289 = vpop.f32.mrb[0].mxu0
    %v290 = vadd.f32 %v209, %v289
    %v291 = vpop.f32.mrb[0].mxu0
    %292 = vdwg.mxu0
    %v293 = vmax.f32 %v285, 0.0
    %v294 = vmax.f32 %v290, 0.0
    %v295 = vld [vmem:[#allocation4] sm:$0xff]
    %v296 = vld [vmem:[#allocation4 + $0x8] sm:$0xff]
    %v297 = vld [vmem:[#allocation4 + $0x10] sm:$0xff]
    %v298 = vld [vmem:[#allocation4 + $0x18] sm:$0xff]
    %v299 = vld [vmem:[#allocation4 + $0x20] sm:$0xff]
    %v300 = vld [vmem:[#allocation4 + $0x28] sm:$0xff]
    %v301 = vld [vmem:[#allocation4 + $0x30] sm:$0xff]
    %v302 = vld [vmem:[#allocation4 + $0x38] sm:$0xff]
    %v303 = vld [vmem:[#allocation4 + $0x40] sm:$0xff]
    %v304 = vld [vmem:[#allocation4 + $0x48] sm:$0xff]
    %v305 = vld [vmem:[#allocation4 + $0x50] sm:$0xff]
    %v306 = vld [vmem:[#allocation4 + $0x58] sm:$0xff]
    %v307 = vld [vmem:[#allocation4 + $0x60] sm:$0xff]
    %v308 = vld [vmem:[#allocation4 + $0x68] sm:$0xff]
    %v309 = vld [vmem:[#allocation4 + $0x70] sm:$0xff]
    %v310 = vld [vmem:[#allocation4 + $0x78] sm:$0xff]
    %311 = vmatprep.subr.mxu0 0.0
    %312 = vmatpush1.msra.mxu0 %v295
    %313 = vmatprep.subr.mxu0 0.0
    %314 = vmatpush1.msra.mxu0 %v296
    %315 = vmatprep.subr.mxu0 0.0
    %316 = vmatpush1.msra.mxu0 %v297
    %317 = vmatprep.subr.mxu0 0.0
    %318 = vmatpush1.msra.mxu0 %v298
    %319 = vmatprep.subr.mxu0 0.0
    %320 = vmatpush1.msra.mxu0 %v299
    %321 = vmatprep.subr.mxu0 0.0
    %322 = vmatpush1.msra.mxu0 %v300
    %323 = vmatprep.subr.mxu0 0.0
    %324 = vmatpush1.msra.mxu0 %v301
    %325 = vmatprep.subr.mxu0 0.0
    %326 = vmatpush1.msra.mxu0 %v302
    %327 = vmatprep.subr.mxu0 0.0
    %328 = vmatpush1.msra.mxu0 %v303
    %329 = vmatprep.subr.mxu0 0.0
    %330 = vmatpush1.msra.mxu0 %v304
    %331 = vmatprep.subr.mxu0 0.0
    %332 = vmatpush1.msra.mxu0 %v305
    %333 = vmatprep.subr.mxu0 0.0
    %334 = vmatpush1.msra.mxu0 %v306
    %335 = vmatprep.subr.mxu0 0.0
    %336 = vmatpush1.msra.mxu0 %v307
    %337 = vmatprep.subr.mxu0 0.0
    %338 = vmatpush1.msra.mxu0 %v308
    %339 = vmatprep.subr.mxu0 0.0
    %340 = vmatpush1.msra.mxu0 %v309
    %341 = vmatprep.subr.mxu0 0.0
    %342 = vmatpush1.msra.mxu0 %v310
    %343 = vmatprep.subr.mxu0 0.0
    %344 = vmatpush1.msra.mxu0 0.0
    %345 = vmatprep.subr.mxu0 0.0
    %346 = vmatpush1.msra.mxu0 0.0
    %347 = vmatprep.subr.mxu0 0.0
    %348 = vmatpush1.msra.mxu0 0.0
    %349 = vmatprep.subr.mxu0 0.0
    %350 = vmatpush1.msra.mxu0 0.0
    %351 = vmatprep.subr.mxu0 0.0
    %352 = vmatpush1.msra.mxu0 0.0
    %353 = vmatprep.subr.mxu0 0.0
    %354 = vmatpush1.msra.mxu0 0.0
    %355 = vmatprep.subr.mxu0 0.0
    %356 = vmatpush1.msra.mxu0 0.0
    %357 = vmatprep.subr.mxu0 0.0
    %358 = vmatpush1.msra.mxu0 0.0
    %359 = vmatprep.subr.mxu0 0.0
    %360 = vmatpush1.msra.mxu0 0.0
    %361 = vmatprep.subr.mxu0 0.0
    %362 = vmatpush1.msra.mxu0 0.0
    %363 = vmatprep.subr.mxu0 0.0
    %364 = vmatpush1.msra.mxu0 0.0
    %365 = vmatprep.subr.mxu0 0.0
    %366 = vmatpush1.msra.mxu0 0.0
    %367 = vmatprep.subr.mxu0 0.0
    %368 = vmatpush1.msra.mxu0 0.0
    %369 = vmatprep.subr.mxu0 0.0
    %370 = vmatpush1.msra.mxu0 0.0
    %371 = vmatprep.subr.mxu0 0.0
    %372 = vmatpush1.msra.mxu0 0.0
    %373 = vmatprep.subr.mxu0 0.0
    %374 = vmatpush1.msra.mxu0 0.0
    %375 = vmatprep.mubr.f32.mxu0 0.0
    %376 = vmatmul.mubr.f32.gmra.mrb[0].mxu0 %v293
    %v377 = vpop.f32.mrb[0].mxu0
    %v378 = vadd.f32 0.0, %v377
    %v379 = vpop.f32.mrb[0].mxu0
    %380 = vmatprep.mubr.f32.mxu0 0.0
    %381 = vmatmul.mubr.f32.gmra.mrb[0].mxu0 %v294
    %v382 = vpop.f32.mrb[0].mxu0
    %v383 = vadd.f32 0.0, %v382
    %v384 = vpop.f32.mrb[0].mxu0
    %385 = vdwg.mxu0
    %v386 = vld [vmem:[%s5] sm:$0x1]
    %v388 = vlaneseq
    %v389 = vshrl.u32 %v388, 7
    %v390 = vsub.s32 0, %v389
    %v391 = vrot.slane %v386, %v390
    %393 = vmatprep.subr.mxu0 0.0
    %394 = vmatpush1.msra.mxu0 %v378
    %395 = vmatprep.subr.mxu0 0.0
    %396 = vmatpush1.msra.mxu0 %v383
    %397 = vmatprep.subr.mxu0 0.0
    %398 = vmatpush1.msra.mxu0 0.0
    %399 = vmatprep.subr.mxu0 0.0
    %400 = vmatpush1.msra.mxu0 0.0
    %401 = vmatprep.subr.mxu0 0.0
    %402 = vmatpush1.msra.mxu0 0.0
    %403 = vmatprep.subr.mxu0 0.0
    %404 = vmatpush1.msra.mxu0 0.0
    %405 = vmatprep.subr.mxu0 0.0
    %406 = vmatpush1.msra.mxu0 0.0
    %407 = vmatprep.subr.mxu0 0.0
    %408 = vmatpush1.msra.mxu0 0.0
    %409 = vmatprep.subr.mxu0 0.0
    %410 = vmatpush1.msra.mxu0 0.0
    %411 = vmatprep.subr.mxu0 0.0
    %412 = vmatpush1.msra.mxu0 0.0
    %413 = vmatprep.subr.mxu0 0.0
    %414 = vmatpush1.msra.mxu0 0.0
    %415 = vmatprep.subr.mxu0 0.0
    %416 = vmatpush1.msra.mxu0 0.0
    %417 = vmatprep.subr.mxu0 0.0
    %418 = vmatpush1.msra.mxu0 0.0
    %419 = vmatprep.subr.mxu0 0.0
    %420 = vmatpush1.msra.mxu0 0.0
    %421 = vmatprep.subr.mxu0 0.0
    %422 = vmatpush1.msra.mxu0 0.0
    %423 = vmatprep.subr.mxu0 0.0
    %424 = vmatpush1.msra.mxu0 0.0
    %425 = vmatprep.subr.mxu0 0.0
    %426 = vmatpush1.msra.mxu0 0.0
    %427 = vmatprep.subr.mxu0 0.0
    %428 = vmatpush1.msra.mxu0 0.0
    %429 = vmatprep.subr.mxu0 0.0
    %430 = vmatpush1.msra.mxu0 0.0
    %431 = vmatprep.subr.mxu0 0.0
    %432 = vmatpush1.msra.mxu0 0.0
    %433 = vmatprep.subr.mxu0 0.0
    %434 = vmatpush1.msra.mxu0 0.0
    %435 = vmatprep.subr.mxu0 0.0
    %436 = vmatpush1.msra.mxu0 0.0
    %437 = vmatprep.subr.mxu0 0.0
    %438 = vmatpush1.msra.mxu0 0.0
    %439 = vmatprep.subr.mxu0 0.0
    %440 = vmatpush1.msra.mxu0 0.0
    %441 = vmatprep.subr.mxu0 0.0
    %442 = vmatpush1.msra.mxu0 0.0
    %443 = vmatprep.subr.mxu0 0.0
    %444 = vmatpush1.msra.mxu0 0.0
    %445 = vmatprep.subr.mxu0 0.0
    %446 = vmatpush1.msra.mxu0 0.0
    %447 = vmatprep.subr.mxu0 0.0
    %448 = vmatpush1.msra.mxu0 0.0
    %449 = vmatprep.subr.mxu0 0.0
    %450 = vmatpush1.msra.mxu0 0.0
    %451 = vmatprep.subr.mxu0 0.0
    %452 = vmatpush1.msra.mxu0 0.0
    %453 = vmatprep.subr.mxu0 0.0
    %454 = vmatpush1.msra.mxu0 0.0
    %455 = vmatprep.subr.mxu0 0.0
    %456 = vmatpush1.msra.mxu0 0.0
    %457 = vmatprep.mubr.f32.mxu0 0.0
    %458 = vmatmul.mubr.f32.gmra.mrb[0].mxu0 %v213
    %v459 = vpop.f32.mrb[0].mxu0
    %v460 = vadd.f32 %v391, %v459
    %v461 = vpop.f32.mrb[0].mxu0
    %462 = vmatprep.mubr.f32.mxu0 0.0
    %463 = vmatmul.mubr.f32.gmra.mrb[0].mxu0 %v216
    %v464 = vpop.f32.mrb[0].mxu0
    %v465 = vadd.f32 %v391, %v464
    %v466 = vpop.f32.mrb[0].mxu0
    %467 = vdwg.mxu0
    %v468 = vmax.f32 %v460, 0.0
    %v469 = vmax.f32 %v465, 0.0
    %v470 = vld [vmem:[#allocation6] sm:$0xff]
    %v471 = vld [vmem:[#allocation6 + $0x8] sm:$0xff]
    %v472 = vld [vmem:[#allocation6 + $0x10] sm:$0xff]
    %v473 = vld [vmem:[#allocation6 + $0x18] sm:$0xff]
    %v474 = vld [vmem:[#allocation6 + $0x20] sm:$0xff]
    %v475 = vld [vmem:[#allocation6 + $0x28] sm:$0xff]
    %v476 = vld [vmem:[#allocation6 + $0x30] sm:$0xff]
    %v477 = vld [vmem:[#allocation6 + $0x38] sm:$0xff]
    %v478 = vld [vmem:[#allocation6 + $0x40] sm:$0xff]
    %v479 = vld [vmem:[#allocation6 + $0x48] sm:$0xff]
    %v480 = vld [vmem:[#allocation6 + $0x50] sm:$0xff]
    %v481 = vld [vmem:[#allocation6 + $0x58] sm:$0xff]
    %v482 = vld [vmem:[#allocation6 + $0x60] sm:$0xff]
    %v483 = vld [vmem:[#allocation6 + $0x68] sm:$0xff]
    %v484 = vld [vmem:[#allocation6 + $0x70] sm:$0xff]
    %v485 = vld [vmem:[#allocation6 + $0x78] sm:$0xff]
    %486 = vmatprep.subr.mxu0 0.0
    %487 = vmatpush1.msra.mxu0 %v470
    %488 = vmatprep.subr.mxu0 0.0
    %489 = vmatpush1.msra.mxu0 %v471
    %490 = vmatprep.subr.mxu0 0.0
    %491 = vmatpush1.msra.mxu0 %v472
    %492 = vmatprep.subr.mxu0 0.0
    %493 = vmatpush1.msra.mxu0 %v473
    %494 = vmatprep.subr.mxu0 0.0
    %495 = vmatpush1.msra.mxu0 %v474
    %496 = vmatprep.subr.mxu0 0.0
    %497 = vmatpush1.msra.mxu0 %v475
    %498 = vmatprep.subr.mxu0 0.0
    %499 = vmatpush1.msra.mxu0 %v476
    %500 = vmatprep.subr.mxu0 0.0
    %501 = vmatpush1.msra.mxu0 %v477
    %502 = vmatprep.subr.mxu0 0.0
    %503 = vmatpush1.msra.mxu0 %v478
    %504 = vmatprep.subr.mxu0 0.0
    %505 = vmatpush1.msra.mxu0 %v479
    %506 = vmatprep.subr.mxu0 0.0
    %507 = vmatpush1.msra.mxu0 %v480
    %508 = vmatprep.subr.mxu0 0.0
    %509 = vmatpush1.msra.mxu0 %v481
    %510 = vmatprep.subr.mxu0 0.0
    %511 = vmatpush1.msra.mxu0 %v482
    %512 = vmatprep.subr.mxu0 0.0
    %513 = vmatpush1.msra.mxu0 %v483
    %514 = vmatprep.subr.mxu0 0.0
    %515 = vmatpush1.msra.mxu0 %v484
    %516 = vmatprep.subr.mxu0 0.0
    %517 = vmatpush1.msra.mxu0 %v485
    %518 = vmatprep.subr.mxu0 0.0
    %519 = vmatpush1.msra.mxu0 0.0
    %520 = vmatprep.subr.mxu0 0.0
    %521 = vmatpush1.msra.mxu0 0.0
    %522 = vmatprep.subr.mxu0 0.0
    %523 = vmatpush1.msra.mxu0 0.0
    %524 = vmatprep.subr.mxu0 0.0
    %525 = vmatpush1.msra.mxu0 0.0
    %526 = vmatprep.subr.mxu0 0.0
    %527 = vmatpush1.msra.mxu0 0.0
    %528 = vmatprep.subr.mxu0 0.0
    %529 = vmatpush1.msra.mxu0 0.0
    %530 = vmatprep.subr.mxu0 0.0
    %531 = vmatpush1.msra.mxu0 0.0
    %532 = vmatprep.subr.mxu0 0.0
    %533 = vmatpush1.msra.mxu0 0.0
    %534 = vmatprep.subr.mxu0 0.0
    %535 = vmatpush1.msra.mxu0 0.0
    %536 = vmatprep.subr.mxu0 0.0
    %537 = vmatpush1.msra.mxu0 0.0
    %538 = vmatprep.subr.mxu0 0.0
    %539 = vmatpush1.msra.mxu0 0.0
    %540 = vmatprep.subr.mxu0 0.0
    %541 = vmatpush1.msra.mxu0 0.0
    %542 = vmatprep.subr.mxu0 0.0
    %543 = vmatpush1.msra.mxu0 0.0
    %544 = vmatprep.subr.mxu0 0.0
    %545 = vmatpush1.msra.mxu0 0.0
    %546 = vmatprep.subr.mxu0 0.0
    %547 = vmatpush1.msra.mxu0 0.0
    %548 = vmatprep.subr.mxu0 0.0
    %549 = vmatpush1.msra.mxu0 0.0
    %550 = vmatprep.mubr.f32.mxu0 0.0
    %551 = vmatmul.mubr.f32.gmra.mrb[0].mxu0 %v468
    %v552 = vpop.f32.mrb[0].mxu0
    %v553 = vadd.f32 0.0, %v552
    %v554 = vpop.f32.mrb[0].mxu0
    %555 = vmatprep.mubr.f32.mxu0 0.0
    %556 = vmatmul.mubr.f32.gmra.mrb[0].mxu0 %v469
    %v557 = vpop.f32.mrb[0].mxu0
    %v558 = vadd.f32 0.0, %v557
    %v559 = vpop.f32.mrb[0].mxu0
    %560 = vdwg.mxu0
    %v561 = vld [vmem:[%s7] sm:$0x1]
    %v563 = vlaneseq
    %v564 = vshrl.u32 %v563, 7
    %v565 = vsub.s32 0, %v564
    %v566 = vrot.slane %v561, %v565
    %568 = vmatprep.subr.mxu0 0.0
    %569 = vmatpush1.msra.mxu0 %v553
    %570 = vmatprep.subr.mxu0 0.0
    %571 = vmatpush1.msra.mxu0 %v558
    %572 = vmatprep.subr.mxu0 0.0
    %573 = vmatpush1.msra.mxu0 0.0
    %574 = vmatprep.subr.mxu0 0.0
    %575 = vmatpush1.msra.mxu0 0.0
    %576 = vmatprep.subr.mxu0 0.0
    %577 = vmatpush1.msra.mxu0 0.0
    %578 = vmatprep.subr.mxu0 0.0
    %579 = vmatpush1.msra.mxu0 0.0
    %580 = vmatprep.subr.mxu0 0.0
    %581 = vmatpush1.msra.mxu0 0.0
    %582 = vmatprep.subr.mxu0 0.0
    %583 = vmatpush1.msra.mxu0 0.0
    %584 = vmatprep.subr.mxu0 0.0
    %585 = vmatpush1.msra.mxu0 0.0
    %586 = vmatprep.subr.mxu0 0.0
    %587 = vmatpush1.msra.mxu0 0.0
    %588 = vmatprep.subr.mxu0 0.0
    %589 = vmatpush1.msra.mxu0 0.0
    %590 = vmatprep.subr.mxu0 0.0
    %591 = vmatpush1.msra.mxu0 0.0
    %592 = vmatprep.subr.mxu0 0.0
    %593 = vmatpush1.msra.mxu0 0.0
    %594 = vmatprep.subr.mxu0 0.0
    %595 = vmatpush1.msra.mxu0 0.0
    %596 = vmatprep.subr.mxu0 0.0
    %597 = vmatpush1.msra.mxu0 0.0
    %598 = vmatprep.subr.mxu0 0.0
    %599 = vmatpush1.msra.mxu0 0.0
    %600 = vmatprep.subr.mxu0 0.0
    %601 = vmatpush1.msra.mxu0 0.0
    %602 = vmatprep.subr.mxu0 0.0
    %603 = vmatpush1.msra.mxu0 0.0
    %604 = vmatprep.subr.mxu0 0.0
    %605 = vmatpush1.msra.mxu0 0.0
    %606 = vmatprep.subr.mxu0 0.0
    %607 = vmatpush1.msra.mxu0 0.0
    %608 = vmatprep.subr.mxu0 0.0
    %609 = vmatpush1.msra.mxu0 0.0
    %610 = vmatprep.subr.mxu0 0.0
    %611 = vmatpush1.msra.mxu0 0.0
    %612 = vmatprep.subr.mxu0 0.0
    %613 = vmatpush1.msra.mxu0 0.0
    %614 = vmatprep.subr.mxu0 0.0
    %615 = vmatpush1.msra.mxu0 0.0
    %616 = vmatprep.subr.mxu0 0.0
    %617 = vmatpush1.msra.mxu0 0.0
    %618 = vmatprep.subr.mxu0 0.0
    %619 = vmatpush1.msra.mxu0 0.0
    %620 = vmatprep.subr.mxu0 0.0
    %621 = vmatpush1.msra.mxu0 0.0
    %622 = vmatprep.subr.mxu0 0.0
    %623 = vmatpush1.msra.mxu0 0.0
    %624 = vmatprep.subr.mxu0 0.0
    %625 = vmatpush1.msra.mxu0 0.0
    %626 = vmatprep.subr.mxu0 0.0
    %627 = vmatpush1.msra.mxu0 0.0
    %628 = vmatprep.subr.mxu0 0.0
    %629 = vmatpush1.msra.mxu0 0.0
    %630 = vmatprep.subr.mxu0 0.0
    %631 = vmatpush1.msra.mxu0 0.0
    %632 = vmatprep.mubr.f32.mxu0 0.0
    %633 = vmatmul.mubr.f32.gmra.mrb[0].mxu0 %v213
    %v634 = vpop.f32.mrb[0].mxu0
    %v635 = vadd.f32 %v566, %v634
    %v636 = vpop.f32.mrb[0].mxu0
    %637 = vmatprep.mubr.f32.mxu0 0.0
    %638 = vmatmul.mubr.f32.gmra.mrb[0].mxu0 %v216
    %v639 = vpop.f32.mrb[0].mxu0
    %v640 = vadd.f32 %v566, %v639
    %v641 = vpop.f32.mrb[0].mxu0
    %642 = vdwg.mxu0
    %v643 = vmax.f32 %v635, 0.0
    %v644 = vmax.f32 %v640, 0.0
    %v645 = vld [vmem:[#allocation7] sm:$0xff]
    %v646 = vld [vmem:[#allocation7 + $0x8] sm:$0xff]
    %v647 = vld [vmem:[#allocation7 + $0x10] sm:$0xff]
    %v648 = vld [vmem:[#allocation7 + $0x18] sm:$0xff]
    %v649 = vld [vmem:[#allocation7 + $0x20] sm:$0xff]
    %v650 = vld [vmem:[#allocation7 + $0x28] sm:$0xff]
    %v651 = vld [vmem:[#allocation7 + $0x30] sm:$0xff]
    %v652 = vld [vmem:[#allocation7 + $0x38] sm:$0xff]
    %v653 = vld [vmem:[#allocation7 + $0x40] sm:$0xff]
    %v654 = vld [vmem:[#allocation7 + $0x48] sm:$0xff]
    %v655 = vld [vmem:[#allocation7 + $0x50] sm:$0xff]
    %v656 = vld [vmem:[#allocation7 + $0x58] sm:$0xff]
    %v657 = vld [vmem:[#allocation7 + $0x60] sm:$0xff]
    %v658 = vld [vmem:[#allocation7 + $0x68] sm:$0xff]
    %v659 = vld [vmem:[#allocation7 + $0x70] sm:$0xff]
    %v660 = vld [vmem:[#allocation7 + $0x78] sm:$0xff]
    %661 = vmatprep.subr.mxu0 0.0
    %662 = vmatpush1.msra.mxu0 %v645
    %663 = vmatprep.subr.mxu0 0.0
    %664 = vmatpush1.msra.mxu0 %v646
    %665 = vmatprep.subr.mxu0 0.0
    %666 = vmatpush1.msra.mxu0 %v647
    %667 = vmatprep.subr.mxu0 0.0
    %668 = vmatpush1.msra.mxu0 %v648
    %669 = vmatprep.subr.mxu0 0.0
    %670 = vmatpush1.msra.mxu0 %v649
    %671 = vmatprep.subr.mxu0 0.0
    %672 = vmatpush1.msra.mxu0 %v650
    %673 = vmatprep.subr.mxu0 0.0
    %674 = vmatpush1.msra.mxu0 %v651
    %675 = vmatprep.subr.mxu0 0.0
    %676 = vmatpush1.msra.mxu0 %v652
    %677 = vmatprep.subr.mxu0 0.0
    %678 = vmatpush1.msra.mxu0 %v653
    %679 = vmatprep.subr.mxu0 0.0
    %680 = vmatpush1.msra.mxu0 %v654
    %681 = vmatprep.subr.mxu0 0.0
    %682 = vmatpush1.msra.mxu0 %v655
    %683 = vmatprep.subr.mxu0 0.0
    %684 = vmatpush1.msra.mxu0 %v656
    %685 = vmatprep.subr.mxu0 0.0
    %686 = vmatpush1.msra.mxu0 %v657
    %687 = vmatprep.subr.mxu0 0.0
    %688 = vmatpush1.msra.mxu0 %v658
    %689 = vmatprep.subr.mxu0 0.0
    %690 = vmatpush1.msra.mxu0 %v659
    %691 = vmatprep.subr.mxu0 0.0
    %692 = vmatpush1.msra.mxu0 %v660
    %693 = vmatprep.subr.mxu0 0.0
    %694 = vmatpush1.msra.mxu0 0.0
    %695 = vmatprep.subr.mxu0 0.0
    %696 = vmatpush1.msra.mxu0 0.0
    %697 = vmatprep.subr.mxu0 0.0
    %698 = vmatpush1.msra.mxu0 0.0
    %699 = vmatprep.subr.mxu0 0.0
    %700 = vmatpush1.msra.mxu0 0.0
    %701 = vmatprep.subr.mxu0 0.0
    %702 = vmatpush1.msra.mxu0 0.0
    %703 = vmatprep.subr.mxu0 0.0
    %704 = vmatpush1.msra.mxu0 0.0
    %705 = vmatprep.subr.mxu0 0.0
    %706 = vmatpush1.msra.mxu0 0.0
    %707 = vmatprep.subr.mxu0 0.0
    %708 = vmatpush1.msra.mxu0 0.0
    %709 = vmatprep.subr.mxu0 0.0
    %710 = vmatpush1.msra.mxu0 0.0
    %711 = vmatprep.subr.mxu0 0.0
    %712 = vmatpush1.msra.mxu0 0.0
    %713 = vmatprep.subr.mxu0 0.0
    %714 = vmatpush1.msra.mxu0 0.0
    %715 = vmatprep.subr.mxu0 0.0
    %716 = vmatpush1.msra.mxu0 0.0
    %717 = vmatprep.subr.mxu0 0.0
    %718 = vmatpush1.msra.mxu0 0.0
    %719 = vmatprep.subr.mxu0 0.0
    %720 = vmatpush1.msra.mxu0 0.0
    %721 = vmatprep.subr.mxu0 0.0
    %722 = vmatpush1.msra.mxu0 0.0
    %723 = vmatprep.subr.mxu0 0.0
    %724 = vmatpush1.msra.mxu0 0.0
    %725 = vmatprep.mubr.f32.mxu0 0.0
    %726 = vmatmul.mubr.f32.gmra.mrb[0].mxu0 %v643
    %v727 = vpop.f32.mrb[0].mxu0
    %v728 = vadd.f32 0.0, %v727
    %v729 = vpop.f32.mrb[0].mxu0
    %730 = vmatprep.mubr.f32.mxu0 0.0
    %731 = vmatmul.mubr.f32.gmra.mrb[0].mxu0 %v644
    %v732 = vpop.f32.mrb[0].mxu0
    %v733 = vadd.f32 0.0, %v732
    %v734 = vpop.f32.mrb[0].mxu0
    %735 = vdwg.mxu0
    %v736 = vld [vmem:[%s9] sm:$0x1]
    %v738 = vlaneseq
    %v739 = vshrl.u32 %v738, 7
    %v740 = vsub.s32 0, %v739
    %v741 = vrot.slane %v736, %v740
    %743 = vmatprep.subr.mxu0 0.0
    %744 = vmatpush1.msra.mxu0 %v728
    %745 = vmatprep.subr.mxu0 0.0
    %746 = vmatpush1.msra.mxu0 %v733
    %747 = vmatprep.subr.mxu0 0.0
    %748 = vmatpush1.msra.mxu0 0.0
    %749 = vmatprep.subr.mxu0 0.0
    %750 = vmatpush1.msra.mxu0 0.0
    %751 = vmatprep.subr.mxu0 0.0
    %752 = vmatpush1.msra.mxu0 0.0
    %753 = vmatprep.subr.mxu0 0.0
    %754 = vmatpush1.msra.mxu0 0.0
    %755 = vmatprep.subr.mxu0 0.0
    %756 = vmatpush1.msra.mxu0 0.0
    %757 = vmatprep.subr.mxu0 0.0
    %758 = vmatpush1.msra.mxu0 0.0
    %759 = vmatprep.subr.mxu0 0.0
    %760 = vmatpush1.msra.mxu0 0.0
    %761 = vmatprep.subr.mxu0 0.0
    %762 = vmatpush1.msra.mxu0 0.0
    %763 = vmatprep.subr.mxu0 0.0
    %764 = vmatpush1.msra.mxu0 0.0
    %765 = vmatprep.subr.mxu0 0.0
    %766 = vmatpush1.msra.mxu0 0.0
    %767 = vmatprep.subr.mxu0 0.0
    %768 = vmatpush1.msra.mxu0 0.0
    %769 = vmatprep.subr.mxu0 0.0
    %770 = vmatpush1.msra.mxu0 0.0
    %771 = vmatprep.subr.mxu0 0.0
    %772 = vmatpush1.msra.mxu0 0.0
    %773 = vmatprep.subr.mxu0 0.0
    %774 = vmatpush1.msra.mxu0 0.0
    %775 = vmatprep.subr.mxu0 0.0
    %776 = vmatpush1.msra.mxu0 0.0
    %777 = vmatprep.subr.mxu0 0.0
    %778 = vmatpush1.msra.mxu0 0.0
    %779 = vmatprep.subr.mxu0 0.0
    %780 = vmatpush1.msra.mxu0 0.0
    %781 = vmatprep.subr.mxu0 0.0
    %782 = vmatpush1.msra.mxu0 0.0
    %783 = vmatprep.subr.mxu0 0.0
    %784 = vmatpush1.msra.mxu0 0.0
    %785 = vmatprep.subr.mxu0 0.0
    %786 = vmatpush1.msra.mxu0 0.0
    %787 = vmatprep.subr.mxu0 0.0
    %788 = vmatpush1.msra.mxu0 0.0
    %789 = vmatprep.subr.mxu0 0.0
    %790 = vmatpush1.msra.mxu0 0.0
    %791 = vmatprep.subr.mxu0 0.0
    %792 = vmatpush1.msra.mxu0 0.0
    %793 = vmatprep.subr.mxu0 0.0
    %794 = vmatpush1.msra.mxu0 0.0
    %795 = vmatprep.subr.mxu0 0.0
    %796 = vmatpush1.msra.mxu0 0.0
    %797 = vmatprep.subr.mxu0 0.0
    %798 = vmatpush1.msra.mxu0 0.0
    %799 = vmatprep.subr.mxu0 0.0
    %800 = vmatpush1.msra.mxu0 0.0
    %801 = vmatprep.subr.mxu0 0.0
    %802 = vmatpush1.msra.mxu0 0.0
    %803 = vmatprep.subr.mxu0 0.0
    %804 = vmatpush1.msra.mxu0 0.0
    %805 = vmatprep.subr.mxu0 0.0
    %806 = vmatpush1.msra.mxu0 0.0
    %807 = vmatprep.mubr.f32.mxu0 0.0
    %808 = vmatmul.mubr.f32.gmra.mrb[0].mxu0 %v213
    %v809 = vpop.f32.mrb[0].mxu0
    %v810 = vadd.f32 %v741, %v809
    %v811 = vpop.f32.mrb[0].mxu0
    %812 = vmatprep.mubr.f32.mxu0 0.0
    %813 = vmatmul.mubr.f32.gmra.mrb[0].mxu0 %v216
    %v814 = vpop.f32.mrb[0].mxu0
    %v815 = vadd.f32 %v741, %v814
    %v816 = vpop.f32.mrb[0].mxu0
    %817 = vdwg.mxu0
    %v818 = vmax.f32 %v810, 0.0
    %v819 = vmax.f32 %v815, 0.0
    %v820 = vld [vmem:[#allocation9] sm:$0xff]
    %v821 = vld [vmem:[#allocation9 + $0x8] sm:$0xff]
    %v822 = vld [vmem:[#allocation9 + $0x10] sm:$0xff]
    %v823 = vld [vmem:[#allocation9 + $0x18] sm:$0xff]
    %v824 = vld [vmem:[#allocation9 + $0x20] sm:$0xff]
    %v825 = vld [vmem:[#allocation9 + $0x28] sm:$0xff]
    %v826 = vld [vmem:[#allocation9 + $0x30] sm:$0xff]
    %v827 = vld [vmem:[#allocation9 + $0x38] sm:$0xff]
    %v828 = vld [vmem:[#allocation9 + $0x40] sm:$0xff]
    %v829 = vld [vmem:[#allocation9 + $0x48] sm:$0xff]
    %v830 = vld [vmem:[#allocation9 + $0x50] sm:$0xff]
    %v831 = vld [vmem:[#allocation9 + $0x58] sm:$0xff]
    %v832 = vld [vmem:[#allocation9 + $0x60] sm:$0xff]
    %v833 = vld [vmem:[#allocation9 + $0x68] sm:$0xff]
    %v834 = vld [vmem:[#allocation9 + $0x70] sm:$0xff]
    %v835 = vld [vmem:[#allocation9 + $0x78] sm:$0xff]
    %v836 = vld [vmem:[%s11] sm:$0x1]
    %v838 = vlaneseq
    %v839 = vshrl.u32 %v838, 7
    %v840 = vsub.s32 0, %v839
    %v841 = vrot.slane %v836, %v840
    %843 = vmatprep.subr.mxu0 0.0
    %844 = vmatpush1.msra.mxu0 %v820
    %845 = vmatprep.subr.mxu0 0.0
    %846 = vmatpush1.msra.mxu0 %v821
    %847 = vmatprep.subr.mxu0 0.0
    %848 = vmatpush1.msra.mxu0 %v822
    %849 = vmatprep.subr.mxu0 0.0
    %850 = vmatpush1.msra.mxu0 %v823
    %851 = vmatprep.subr.mxu0 0.0
    %852 = vmatpush1.msra.mxu0 %v824
    %853 = vmatprep.subr.mxu0 0.0
    %854 = vmatpush1.msra.mxu0 %v825
    %855 = vmatprep.subr.mxu0 0.0
    %856 = vmatpush1.msra.mxu0 %v826
    %857 = vmatprep.subr.mxu0 0.0
    %858 = vmatpush1.msra.mxu0 %v827
    %859 = vmatprep.subr.mxu0 0.0
    %860 = vmatpush1.msra.mxu0 %v828
    %861 = vmatprep.subr.mxu0 0.0
    %862 = vmatpush1.msra.mxu0 %v829
    %863 = vmatprep.subr.mxu0 0.0
    %864 = vmatpush1.msra.mxu0 %v830
    %865 = vmatprep.subr.mxu0 0.0
    %866 = vmatpush1.msra.mxu0 %v831
    %867 = vmatprep.subr.mxu0 0.0
    %868 = vmatpush1.msra.mxu0 %v832
    %869 = vmatprep.subr.mxu0 0.0
    %870 = vmatpush1.msra.mxu0 %v833
    %871 = vmatprep.subr.mxu0 0.0
    %872 = vmatpush1.msra.mxu0 %v834
    %873 = vmatprep.subr.mxu0 0.0
    %874 = vmatpush1.msra.mxu0 %v835
    %875 = vmatprep.subr.mxu0 0.0
    %876 = vmatpush1.msra.mxu0 0.0
    %877 = vmatprep.subr.mxu0 0.0
    %878 = vmatpush1.msra.mxu0 0.0
    %879 = vmatprep.subr.mxu0 0.0
    %880 = vmatpush1.msra.mxu0 0.0
    %881 = vmatprep.subr.mxu0 0.0
    %882 = vmatpush1.msra.mxu0 0.0
    %883 = vmatprep.subr.mxu0 0.0
    %884 = vmatpush1.msra.mxu0 0.0
    %885 = vmatprep.subr.mxu0 0.0
    %886 = vmatpush1.msra.mxu0 0.0
    %887 = vmatprep.subr.mxu0 0.0
    %888 = vmatpush1.msra.mxu0 0.0
    %889 = vmatprep.subr.mxu0 0.0
    %890 = vmatpush1.msra.mxu0 0.0
    %891 = vmatprep.subr.mxu0 0.0
    %892 = vmatpush1.msra.mxu0 0.0
    %893 = vmatprep.subr.mxu0 0.0
    %894 = vmatpush1.msra.mxu0 0.0
    %895 = vmatprep.subr.mxu0 0.0
    %896 = vmatpush1.msra.mxu0 0.0
    %897 = vmatprep.subr.mxu0 0.0
    %898 = vmatpush1.msra.mxu0 0.0
    %899 = vmatprep.subr.mxu0 0.0
    %900 = vmatpush1.msra.mxu0 0.0
    %901 = vmatprep.subr.mxu0 0.0
    %902 = vmatpush1.msra.mxu0 0.0
    %903 = vmatprep.subr.mxu0 0.0
    %904 = vmatpush1.msra.mxu0 0.0
    %905 = vmatprep.subr.mxu0 0.0
    %906 = vmatpush1.msra.mxu0 0.0
    %907 = vmatprep.mubr.f32.mxu0 0.0
    %908 = vmatmul.mubr.f32.gmra.mrb[0].mxu0 %v818
    %v909 = vpop.f32.mrb[0].mxu0
    %v910 = vadd.f32 %v841, %v909
    %v911 = vpop.f32.mrb[0].mxu0
    %912 = vmatprep.mubr.f32.mxu0 0.0
    %913 = vmatmul.mubr.f32.gmra.mrb[0].mxu0 %v819
    %v914 = vpop.f32.mrb[0].mxu0
    %v915 = vadd.f32 %v841, %v914
    %v916 = vpop.f32.mrb[0].mxu0
    %917 = vdwg.mxu0
    %v918 = vlaneseq
    %v919 = vand.u32 %v918, 127
    %vm920 = vcmp.lt.s32.totalorder %v919, 8
    %v921 = vsel %vm920, %v910, -1e+30
    %v922 = vsel %vm920, %v915, -1e+30
    %923 = vmax.xlane.f32.xlu0 %v921
    %v924 = vpop.xlane.xlu0 %923
    %925 = vmax.xlane.f32.xlu0 %v922
    %v926 = vpop.xlane.xlu0 %925
    %v927 = vsub.f32 %v921, %v924
    %v928 = vsub.f32 %v922, %v926
    %v929 = vmul.f32 %v927, 1.442695
    %v930 = vpow.pop %v929
    %v931 = vmul.f32 %v928, 1.442695
    %v932 = vpow.pop %v931
    %933 = vadd.xlane.f32.xlu0 %v930
    %v934 = vpop.xlane.xlu0 %933
    %935 = vadd.xlane.f32.xlu0 %v932
    %v936 = vpop.xlane.xlu0 %935
    %v937 = vlog2.pop %v934
    %v938 = vmul.f32 %v937, 0.6931472
    %v939 = vlog2.pop %v936
    %v940 = vmul.f32 %v939, 0.6931472
    %v941 = vsub.f32 %v927, %v938
    %v942 = vsub.f32 %v928, %v940
    %943 = vst [vmem:[%s12] sm:$0xff] %v941
    %944 = vst [vmem:[%s12 + $0x8] sm:$0xff] %v942
    // Predicated region
    $region70: #{_forward_impl.1} parent=1 // pred_check
      _
    $region71: #{_forward_impl.1} parent=1 // pred_check_branch
      %946 = sbr.rel (0) target = $region73
    $region72: #{_forward_impl.1} parent=1 // pred_region
      _
    $region73: #{_forward_impl.1} parent=1 // pred_fallthru
      _
    // Predicated region
    $region74: #{_forward_impl.1} parent=1 // pred_check
      _
    $region75: #{_forward_impl.1} parent=1 // pred_check_branch
      %948 = sbr.rel (0) target = $region77
    $region76: #{_forward_impl.1} parent=1 // pred_region
      _
    $region77: #{_forward_impl.1} parent=1 // pred_fallthru
      _
    %949 = vsyncpa [#allocation3], 1
    %950 = vsyncpa [#allocation5], 1
    %951 = vsyncpa [#allocation8], 1

</llo_original>
